<compile_context>
chip_gen: v6e
topology: v6e:2x2x1
jax: 0.10.0
libtpu: 0.0.40
codegen_flags: <defaults>
</compile_context>

<pallas_src>
import jax
import jax.numpy as jnp
from jax import lax
from jax.experimental import pallas as pl
from jax.experimental.pallas import tpu as pltpu

LANE = 128          # conv output channels padded to a multiple of this
# TODO(synk): pad to 256 on v6e/v7x when feat is not already a multiple of 256
# (fills the 2x256^2 MXU); 128 keeps v5e optimal and is a no-op at feat=256.
TM_CAP = 1024       # max rows per matmul tile


def _phys_vmem_bytes():
    try:
        return int(pltpu.get_tpu_info().vmem_capacity_bytes)
    except Exception:
        return 64 * 1024 * 1024          # conservative default (v7x per-core VMEM)


_PHYS_VMEM = _phys_vmem_bytes()
VMEM_LIMIT = min((_PHYS_VMEM * 3) // 4, 112 * 1024 * 1024)   # scoped-VMEM limit
TILE_BUDGET = VMEM_LIMIT // 2                                # per-kernel working-set target


def _round_up(x, m):
    return (x + m - 1) // m * m


def _row_tile_mm(rows, cap):
    """Row tile for 2-D matmul blocks: multiple of 8 (sublane) or the full extent.
    Prefers an exact divisor of `rows` (no padding); pads only as a last resort."""
    cap = max(8, min(rows, cap))
    if rows <= cap:
        return rows, rows                 # full-extent block, always legal
    t = (cap // 8) * 8
    while t >= 8:
        if rows % t == 0:
            return t, rows                # exact multiple-of-8 divisor, no padding
        t -= 8
    t = max(8, (cap // 8) * 8)
    # TODO(synk): a masked remainder tile would avoid this (rare) pad + re-slice.
    return t, _round_up(rows, t)


def _row_tile_div(rows, cap):
    """Largest divisor of `rows` <= cap (leading-dim tiles, no (8,128) rule)."""
    cap = max(1, min(rows, cap, 2048))
    for t in range(cap, 0, -1):
        if rows % t == 0:
            return t
    return 1


def _pad_cout(w, b):
    """Zero-pad the last (output-channel) dim of w and b up to a LANE multiple."""
    cout = w.shape[-1]
    coutp = _round_up(cout, LANE)
    if coutp != cout:
        w = jnp.pad(w, [(0, 0)] * (w.ndim - 1) + [(0, coutp - cout)])
        b = jnp.pad(b, (0, coutp - cout))
    return w, b


# ----------------------------- matmul (+bias) -------------------------------
# Used for the 1x1 lateral convs and the (small) stride-2 im2col convs.

def _matmul_bias_kernel(x_ref, w_ref, b_ref, o_ref):
    acc = jnp.dot(x_ref[...], w_ref[...], preferred_element_type=jnp.float32)
    o_ref[...] = (acc + b_ref[...]).astype(o_ref.dtype)


def _matmul_bias(x2d, w, b, *, out_dtype):
    """x2d: (M, K) bf16, w: (K, Coutp) bf16, b: (Coutp,) f32 -> (M, Coutp)."""
    M, K = x2d.shape
    Coutp = w.shape[1]
    out_bytes = jnp.dtype(out_dtype).itemsize
    # VMEM-aware row cap: double-buffered x + out tiles, resident weights/bias,
    # and the f32 accumulator must fit the tile budget (critical on v7x, 64 MiB).
    fixed = K * Coutp * 2 + Coutp * 4
    per_row = 2 * K * 2 + 2 * Coutp * out_bytes + Coutp * 4
    cap = max(8, min(TM_CAP, (TILE_BUDGET - fixed) // max(per_row, 1)))
    TM, Mp = _row_tile_mm(M, cap)
    if Mp != M:
        x2d = jnp.pad(x2d, ((0, Mp - M), (0, 0)))
    b2 = b.reshape(1, Coutp).astype(jnp.float32)
    # TODO(synk): add a K grid axis (+ f32 VMEM accumulator) for huge K instead
    # of only shrinking TM; and a second "parallel" Cout axis so small-M calls
    # keep both v7x TensorCores busy.
    out = pl.pallas_call(
        _matmul_bias_kernel,
        out_shape=jax.ShapeDtypeStruct((Mp, Coutp), out_dtype),
        grid_spec=pltpu.PrefetchScalarGridSpec(
            num_scalar_prefetch=0,
            grid=(Mp // TM,),
            in_specs=[
                pl.BlockSpec((TM, K), lambda i: (i, 0)),
                pl.BlockSpec((K, Coutp), lambda i: (0, 0)),   # VMEM-resident weights
                pl.BlockSpec((1, Coutp), lambda i: (0, 0)),   # VMEM-resident bias
            ],
            out_specs=pl.BlockSpec((TM, Coutp), lambda i: (i, 0)),
        ),
        compiler_params=pltpu.CompilerParams(
            dimension_semantics=("parallel",),
            vmem_limit_bytes=VMEM_LIMIT),
    )(x2d, w, b2)
    return out[:M] if Mp != M else out


def conv1x1(x, w, b, *, out_dtype=jnp.bfloat16):
    """x: NHWC, w: (Cin, Cout), b: (Cout,).  Output channels padded to LANE."""
    N, H, W, Cin = x.shape
    wp, bp = _pad_cout(w, b)
    out = _matmul_bias(x.astype(jnp.bfloat16).reshape(N * H * W, Cin),
                       wp.astype(jnp.bfloat16), bp, out_dtype=out_dtype)
    return out.reshape(N, H, W, -1)


# ------------------- stride-1 3x3 conv: halo DMA, no im2col -----------------

def _conv3x3_halo_kernel(x_hbm, w_ref, b_ref, o_ref, xbuf, sem):
    """One (image, row-tile) step: DMA row tile + 1-row halo, 9 tap dots."""
    _, TR, Wo, Coutp = o_ref.shape
    Cin = w_ref.shape[1]
    n = pl.program_id(0)
    i = pl.program_id(1)
    nrow = pl.num_programs(1)
    slot = i % 2

    def copy(row_tile, sl):
        return pltpu.make_async_copy(
            x_hbm.at[n, pl.ds(row_tile * TR, TR + 2), :, :],
            xbuf.at[sl], sem.at[sl])

    @pl.when(i == 0)
    def _():
        copy(0, 0).start()                      # prime slot 0 for this image

    @pl.when(i + 1 < nrow)
    def _():
        copy(i + 1, 1 - slot).start()           # prefetch next row tile

    copy(i, slot).wait()

    acc = jnp.zeros((TR * Wo, Coutp), jnp.float32)
    for t in range(9):
        kh, kw = divmod(t, 3)
        xs = xbuf[slot, pl.ds(kh, TR), pl.ds(kw, Wo), :]          # (TR, Wo, Cin) bf16
        acc = acc + jnp.dot(xs.reshape(TR * Wo, Cin), w_ref[t],
                            preferred_element_type=jnp.float32)
    out = acc + b_ref[...]
    o_ref[...] = out.reshape(o_ref.shape).astype(o_ref.dtype)


def _conv3x3_s1(x, w, b, *, out_dtype):
    """stride-1, pad-1 3x3 conv.  x: NHWC (channels may be LANE-padded)."""
    N, H, W, Cx = x.shape
    _, _, Cw, Cout = w.shape
    if Cx != Cw:                          # input carries zero-padded channels
        w = jnp.pad(w, ((0, 0), (0, 0), (0, Cx - Cw), (0, 0)))
    wp, bp = _pad_cout(w, b)
    Coutp = wp.shape[-1]
    wk = wp.reshape(9, Cx, Coutp).astype(jnp.bfloat16)
    b2 = bp.reshape(1, Coutp).astype(jnp.float32)

    Ho, Wo, Wp = H, W, W + 2
    xp = jnp.pad(x.astype(jnp.bfloat16), ((0, 0), (1, 1), (1, 1), (0, 0)))
    # TODO(synk): fuse the FPN merge (upsample+add) into this input stage so the
    # merged P3_x/P4_x maps never round-trip HBM.

    out_bytes = jnp.dtype(out_dtype).itemsize
    fixed = 9 * Cx * Coutp * 2 + Coutp * 4
    per_row = 2 * Wp * Cx * 2 + 2 * Wo * Coutp * out_bytes + Wo * Coutp * 4
    cap = max(1, (TILE_BUDGET - fixed) // max(per_row, 1))
    TR = _row_tile_div(Ho, min(cap, 1024))
    nrow = Ho // TR

    # TODO(synk): split N as a "parallel" axis once per-core scratch duplication
    # is confirmed; manual-DMA scratch forces "arbitrary" here for correctness.
    return pl.pallas_call(
        _conv3x3_halo_kernel,
        out_shape=jax.ShapeDtypeStruct((N, Ho, Wo, Coutp), out_dtype),
        grid_spec=pltpu.PrefetchScalarGridSpec(
            num_scalar_prefetch=0,
            grid=(N, nrow),
            in_specs=[
                pl.BlockSpec(memory_space=pl.ANY),                    # padded x, HBM
                pl.BlockSpec((9, Cx, Coutp), lambda n, i: (0, 0, 0)),  # resident w
                pl.BlockSpec((1, Coutp), lambda n, i: (0, 0)),         # resident b
            ],
            out_specs=pl.BlockSpec((1, TR, Wo, Coutp), lambda n, i: (n, i, 0, 0)),
            scratch_shapes=[
                pltpu.VMEM((2, TR + 2, Wp, Cx), jnp.bfloat16),   # double-buffered halo tile
                pltpu.SemaphoreType.DMA((2,)),
            ]),
        compiler_params=pltpu.CompilerParams(
            dimension_semantics=("arbitrary", "arbitrary"),
            vmem_limit_bytes=VMEM_LIMIT),
    )(xp, wk, b2)


def _conv3x3_im2col(x, w, b, *, stride, out_dtype):
    """3x3 conv, pad=1, stride>1.
    TODO(synk): only the small stride-2 maps (P6/P7) take this im2col path; the
    perf-critical stride-1 convs use the halo kernel above."""
    N, H, W, Cx = x.shape
    _, _, Cw, Cout = w.shape
    if Cx != Cw:
        w = jnp.pad(w, ((0, 0), (0, 0), (0, Cx - Cw), (0, 0)))
    Ho = (H + 2 - 3) // stride + 1
    Wo = (W + 2 - 3) // stride + 1
    xp = jnp.pad(x.astype(jnp.bfloat16), ((0, 0), (1, 1), (1, 1), (0, 0)))
    taps = [xp[:, kh::stride, kw::stride, :][:, :Ho, :Wo, :]
            for kh in range(3) for kw in range(3)]
    patches = jnp.concatenate(taps, axis=-1).reshape(N * Ho * Wo, 9 * Cx)
    wp, bp = _pad_cout(w.reshape(9 * Cx, Cout), b)
    out = _matmul_bias(patches, wp.astype(jnp.bfloat16), bp, out_dtype=out_dtype)
    return out.reshape(N, Ho, Wo, -1)


def conv3x3(x, w, b, *, stride=1, out_dtype=jnp.float32):
    if stride == 1:
        return _conv3x3_s1(x, w, b, out_dtype=out_dtype)
    return _conv3x3_im2col(x, w, b, stride=stride, out_dtype=out_dtype)


# ---------------------- FPN merge (2x upsample + add) ------------------------

def _upsample_add_kernel(f_ref, c_ref, o_ref):
    """out = fine + nearest_upsample_2x(coarse); H and W replication in-kernel."""
    c = c_ref[...]                                            # (trc, Wc, C)
    trc, wc, ch = c.shape
    # W-replication: out[w] = c[w // 2]
    cw = jnp.broadcast_to(c[:, :, None, :], (trc, wc, 2, ch)).reshape(trc, 2 * wc, ch)
    # H-replication: free leading-dim split of the fine tile
    f = f_ref[...].reshape(trc, 2, 2 * wc, ch)
    o_ref[...] = (f + cw[:, None, :, :]).reshape(2 * trc, 2 * wc, ch).astype(o_ref.dtype)


def upsample2x_add(coarse, fine):
    N, Hc, Wc, C = coarse.shape
    Nf, Hf, Wf, Cf = fine.shape
    assert (Nf, Hf, Wf, Cf) == (N, 2 * Hc, 2 * Wc, C)
    rows_c = N * Hc
    itemsize = jnp.dtype(fine.dtype).itemsize
    per_row = (4 * Wf * C + Wc * C) * 2 * itemsize            # fine+out dbl-buf + coarse
    trc = _row_tile_div(rows_c, max(1, TILE_BUDGET // max(per_row, 1)))
    out = pl.pallas_call(
        _upsample_add_kernel,
        out_shape=jax.ShapeDtypeStruct((N * Hf, Wf, C), fine.dtype),
        grid_spec=pltpu.PrefetchScalarGridSpec(
            num_scalar_prefetch=0,
            grid=(rows_c // trc,),
            in_specs=[pl.BlockSpec((2 * trc, Wf, C), lambda i: (i, 0, 0)),
                      pl.BlockSpec((trc, Wc, C), lambda i: (i, 0, 0))],
            out_specs=pl.BlockSpec((2 * trc, Wf, C), lambda i: (i, 0, 0)),
        ),
        compiler_params=pltpu.CompilerParams(
            dimension_semantics=("parallel",), vmem_limit_bytes=VMEM_LIMIT),
    )(fine.reshape(N * Hf, Wf, C), coarse.reshape(N * Hc, Wc, C))
    return out.reshape(N, Hf, Wf, C)


def nearest_upsample(x, out_h, out_w):
    """torch F.interpolate(mode='nearest'): src = floor(dst * in/out).  XLA glue."""
    N, H, W, C = x.shape
    hi = (jnp.arange(out_h) * H // out_h).astype(jnp.int32)
    wi = (jnp.arange(out_w) * W // out_w).astype(jnp.int32)
    return x[:, hi][:, :, wi]


def _fpn_merge(coarse, fine):
    _, Hc, Wc, _ = coarse.shape
    _, Hf, Wf, _ = fine.shape
    if Hf == 2 * Hc and Wf == 2 * Wc:
        return upsample2x_add(coarse, fine)
    # TODO(synk): non-2x ratios fall back to an XLA gather + add (not Pallas).
    return fine + nearest_upsample(coarse, Hf, Wf)


# --------------------------- PyramidFeatures --------------------------------

def pyramid_features(params, C3, C4, C5):
    """Inputs/outputs NHWC.  Mirrors PyramidFeatures.forward."""
    feat = params["P3_1_b"].shape[0]

    # lateral 1x1 convs -> bf16 intermediates (halved HBM write+readback)
    P3_l = conv1x1(C3, params["P3_1_w"], params["P3_1_b"])
    P4_l = conv1x1(C4, params["P4_1_w"], params["P4_1_b"])
    P5_x = conv1x1(C5, params["P5_1_w"], params["P5_1_b"])

    P4_x = _fpn_merge(P5_x, P4_l)          # P4 + up(P5)
    P3_x = _fpn_merge(P4_x, P3_l)          # P3 + up(P4)

    P3_o = conv3x3(P3_x, params["P3_2_w"], params["P3_2_b"], stride=1)
    P4_o = conv3x3(P4_x, params["P4_2_w"], params["P4_2_b"], stride=1)
    P5_o = conv3x3(P5_x, params["P5_2_w"], params["P5_2_b"], stride=1)

    P6_o = conv3x3(C5, params["P6_w"], params["P6_b"], stride=2)
    # P7_1 ReLU on the f32 P6 output (exact; avoids a bf16 VPU promote on v5e)
    P7_o = conv3x3(jnp.maximum(P6_o, 0.0), params["P7_2_w"], params["P7_2_b"],
                   stride=2)

    # strip the LANE padding from the channel dim of every pyramid output
    return [o[..., :feat] for o in (P3_o, P4_o, P5_o, P6_o, P7_o)]


# ------------------------------ reference -----------------------------------

def _ref_conv(x, w, b, stride):
    dn = ("NHWC", "HWIO", "NHWC")
    pad = [(1, 1), (1, 1)] if w.shape[0] == 3 else [(0, 0), (0, 0)]
    y = lax.conv_general_dilated(x, w, (stride, stride), pad, dimension_numbers=dn)
    return y + b


def pyramid_features_ref(params, C3, C4, C5):
    _, h4, w4, _ = C4.shape
    _, h3, w3, _ = C3.shape
    P3_x = _ref_conv(C3, params["P3_1_w"][None, None], params["P3_1_b"], 1)
    P4_x = _ref_conv(C4, params["P4_1_w"][None, None], params["P4_1_b"], 1)
    P5_x = _ref_conv(C5, params["P5_1_w"][None, None], params["P5_1_b"], 1)
    P4_x = nearest_upsample(P5_x, h4, w4) + P4_x
    P3_x = P3_x + nearest_upsample(P4_x, h3, w3)
    P3_x = _ref_conv(P3_x, params["P3_2_w"], params["P3_2_b"], 1)
    P4_x = _ref_conv(P4_x, params["P4_2_w"], params["P4_2_b"], 1)
    P5_x = _ref_conv(P5_x, params["P5_2_w"], params["P5_2_b"], 1)
    P6_x = _ref_conv(C5, params["P6_w"], params["P6_b"], 2)
    P7_x = _ref_conv(jnp.maximum(P6_x, 0.0), params["P7_2_w"], params["P7_2_b"], 2)
    return [P3_x, P4_x, P5_x, P6_x, P7_x]


# -------------------------------- main ---------------------------------------

if __name__ == "__main__":
    N = 2
    C3_size, C4_size, C5_size, feat = 8, 16, 32, 32

    key = jax.random.PRNGKey(0)
    keys = jax.random.split(key, 32)
    ki = iter(range(32))

    C3 = jax.random.normal(keys[next(ki)], (N, 16, 16, C3_size), jnp.float32)
    C4 = jax.random.normal(keys[next(ki)], (N, 8, 8, C4_size), jnp.float32)
    C5 = jax.random.normal(keys[next(ki)], (N, 4, 4, C5_size), jnp.float32)

    def init_w(k, shape, fan_in):
        bound = 1.0 / (fan_in ** 0.5)
        return jax.random.uniform(k, shape, jnp.float32, -bound, bound)

    params = {}
    # 1x1 lateral convs: weight (Cin, Cout)
    for name, cin in (("P3_1", C3_size), ("P4_1", C4_size), ("P5_1", C5_size)):
        params[f"{name}_w"] = init_w(keys[next(ki)], (cin, feat), cin)
        params[f"{name}_b"] = init_w(keys[next(ki)], (feat,), cin)
    # 3x3 convs: weight (3, 3, Cin, Cout)
    for name, cin in (("P3_2", feat), ("P4_2", feat), ("P5_2", feat),
                      ("P6", C5_size), ("P7_2", feat)):
        params[f"{name}_w"] = init_w(keys[next(ki)], (3, 3, cin, feat), cin * 9)
        params[f"{name}_b"] = init_w(keys[next(ki)], (feat,), cin * 9)

    outs = pyramid_features(params, C3, C4, C5)
    outs = [jax.block_until_ready(o) for o in outs]

    refs = pyramid_features_ref(params, C3, C4, C5)
    # Tolerance is a deliberate precision choice: bf16 MXU operands AND bf16
    # intermediate maps (with f32 in-kernel accumulation) vs. an all-f32 reference.
    for o, r in zip(outs, refs):
        assert o.shape == r.shape, (o.shape, r.shape)
        err = float(jnp.max(jnp.abs(o - r)))
        assert jnp.allclose(o, r, atol=5e-2, rtol=5e-2), err

    print("KERNEL_OK")
</pallas_src>

<mosaic_0001>
module attributes {stable_mosaic.version = 11 : i64} {
  func.func @_matmul_bias_kernel(%arg0: i32, %arg1: memref<512x8xbf16, #tpu.memory_space<vmem>>, %arg2: memref<8x128xbf16, #tpu.memory_space<vmem>>, %arg3: memref<1x128xf32, #tpu.memory_space<vmem>>, %arg4: memref<512x128xbf16, #tpu.memory_space<vmem>>) attributes {dimension_semantics = [#tpu.dimension_semantics<parallel>], iteration_bounds = array<i64: 1>, scalar_prefetch = 0 : i64, scratch_operands = 0 : i64, tpu.core_type = #tpu.core_type<tc>, window_params = [{transform_indices = @transform_0, window_bounds = array<i64: 512, 8>}, {pipeline_mode = #tpu.pipeline_mode<synchronous>, transform_indices = @transform_1, window_bounds = array<i64: 8, 128>}, {pipeline_mode = #tpu.pipeline_mode<synchronous>, transform_indices = @transform_2, window_bounds = array<i64: 1, 128>}, {transform_indices = @transform_3, window_bounds = array<i64: 512, 128>}]} {
    %c0 = arith.constant 0 : index
    %c0_0 = arith.constant 0 : index
    %0 = vector.load %arg1[%c0, %c0_0] : memref<512x8xbf16, #tpu.memory_space<vmem>>, vector<512x8xbf16>
    %c0_1 = arith.constant 0 : index
    %c0_2 = arith.constant 0 : index
    %1 = vector.load %arg2[%c0_1, %c0_2] : memref<8x128xbf16, #tpu.memory_space<vmem>>, vector<8x128xbf16>
    %cst = arith.constant dense<0.000000e+00> : vector<512x128xf32>
    %2 = tpu.matmul %0, %1, %cst {dimension_numbers = #tpu.dot_dimension_numbers<[1], [0], [0], [1], [0, 0, 1, 1], [], []>} : vector<512x8xbf16>, vector<8x128xbf16>, vector<512x128xf32> -> vector<512x128xf32>
    %c0_3 = arith.constant 0 : index
    %c0_4 = arith.constant 0 : index
    %3 = vector.load %arg3[%c0_3, %c0_4] : memref<1x128xf32, #tpu.memory_space<vmem>>, vector<1x128xf32>
    %4 = vector.broadcast %3 : vector<1x128xf32> to vector<512x128xf32>
    %5 = arith.addf %2, %4 : vector<512x128xf32>
    %6 = arith.truncf %5 : vector<512x128xf32> to vector<512x128xbf16>
    %c0_5 = arith.constant 0 : index
    %c0_6 = arith.constant 0 : index
    %7 = vector.load %arg4[%c0_5, %c0_6] : memref<512x128xbf16, #tpu.memory_space<vmem>>, vector<512x128xbf16>
    tpu.vector_store %arg4[%c0_5, %c0_6], %6 {strides = array<i32>} : memref<512x128xbf16, #tpu.memory_space<vmem>>, vector<512x128xbf16>,
    return
  }
  func.func @transform_0(%arg0: i32) -> (i32, i32) {
    %c0_i32 = arith.constant 0 : i32
    %c0_i32_0 = arith.constant 0 : i32
    return %arg0, %c0_i32 : i32, i32
  }
  func.func @transform_1(%arg0: i32) -> (i32, i32) {
    %c0_i32 = arith.constant 0 : i32
    %c0_i32_0 = arith.constant 0 : i32
    %c0_i32_1 = arith.constant 0 : i32
    return %c0_i32, %c0_i32_0 : i32, i32
  }
  func.func @transform_2(%arg0: i32) -> (i32, i32) {
    %c0_i32 = arith.constant 0 : i32
    %c0_i32_0 = arith.constant 0 : i32
    %c0_i32_1 = arith.constant 0 : i32
    return %c0_i32, %c0_i32_0 : i32, i32
  }
  func.func @transform_3(%arg0: i32) -> (i32, i32) {
    %c0_i32 = arith.constant 0 : i32
    %c0_i32_0 = arith.constant 0 : i32
    return %arg0, %c0_i32 : i32, i32
  }
}

</mosaic_0001>

<llo_original>
// kernel: tpu_custom_call.1
$region0: #{tpu_custom_call.1}
  #allocation0 [shape = 'u32[]', space=smem, size = 0x4, offset = 0x4, fixed_abs, tag = 'smem constant byte address 0x4 - core index']
  #allocation1 [shape = 'u32[144,128]{1,0:T(1,128)}', space=vmem, size = 0x12000, scoped, tag = 'internal scratch']
  %s0 = inlined_call_operand.vmem [shape: bf16[512,8], index: 0, kind: input, shape index: {}]
  %s1 = inlined_call_operand.vmem [shape: bf16[8,128], index: 1, kind: input, shape index: {}]
  %s2 = inlined_call_operand.vmem [shape: f32[1,128], index: 2, kind: input, shape index: {}]
  %s3 = inlined_call_operand.hbm [shape: bf16[512,128], index: 3, kind: output, shape index: {}]
  %s4 = sld [smem:[#allocation0]]
  $region22: #{tpu_custom_call.1} parent=0
    _
  %s6 = ssub.s32 1, %s4
  %s7 = scalar_select 0, %s6, %s4
  $region1: #{tpu_custom_call.1} parent=0
    #allocation2 [shape = 'u8[131072]{0}', space=vmem, size = 0x20000, scoped, tag = 'output window, operand 0, single buffered']
    #allocation3 [shape = 's32[1]{0}', space=sflag, size = 0x4, scoped, tag = 'scoped memory for tpu_custom_call.1']
    %8 = vsyncpa [#allocation3], 0
    // Predicated region
    $region2: #{tpu_custom_call.1} parent=1 // pred_check
      _
    $region3: #{tpu_custom_call.1} parent=1 // pred_check_branch
      %10 = sbr.rel (0) target = $region5
    $region4: #{tpu_custom_call.1} parent=1 // pred_region
      _
    $region5: #{tpu_custom_call.1} parent=1 // pred_fallthru
      _
    // Predicated region
    $region6: #{tpu_custom_call.1} parent=1 // pred_check
      _
    $region7: #{tpu_custom_call.1} parent=1 // pred_check_branch
      %12 = sbr.rel (0) target = $region9
    $region8: #{tpu_custom_call.1} parent=1 // pred_region
      _
    $region9: #{tpu_custom_call.1} parent=1 // pred_fallthru
      _
    // Predicated region
    $region10: #{tpu_custom_call.1} parent=1 // pred_check
      _
    $region11: #{tpu_custom_call.1} parent=1 // pred_check_branch
      %14 = sbr.rel (0) target = $region13
    $region12: #{tpu_custom_call.1} parent=1 // pred_region
      _
    $region13: #{tpu_custom_call.1} parent=1 // pred_fallthru
      _
    %v16 = vld [vmem:[%s0] sm:$0xf]
    %v17 = vld [vmem:[%s0 + $0x4] sm:$0xf]
    %v18 = vld [vmem:[%s0 + $0x8] sm:$0xf]
    %v19 = vld [vmem:[%s0 + $0xc] sm:$0xf]
    %v20 = vld [vmem:[%s0 + $0x10] sm:$0xf]
    %v21 = vld [vmem:[%s0 + $0x14] sm:$0xf]
    %v22 = vld [vmem:[%s0 + $0x18] sm:$0xf]
    %v23 = vld [vmem:[%s0 + $0x1c] sm:$0xf]
    %v24 = vld [vmem:[%s0 + $0x20] sm:$0xf]
    %v25 = vld [vmem:[%s0 + $0x24] sm:$0xf]
    %v26 = vld [vmem:[%s0 + $0x28] sm:$0xf]
    %v27 = vld [vmem:[%s0 + $0x2c] sm:$0xf]
    %v28 = vld [vmem:[%s0 + $0x30] sm:$0xf]
    %v29 = vld [vmem:[%s0 + $0x34] sm:$0xf]
    %v30 = vld [vmem:[%s0 + $0x38] sm:$0xf]
    %v31 = vld [vmem:[%s0 + $0x3c] sm:$0xf]
    %v32 = vld [vmem:[%s0 + $0x40] sm:$0xf]
    %v33 = vld [vmem:[%s0 + $0x44] sm:$0xf]
    %v34 = vld [vmem:[%s0 + $0x48] sm:$0xf]
    %v35 = vld [vmem:[%s0 + $0x4c] sm:$0xf]
    %v36 = vld [vmem:[%s0 + $0x50] sm:$0xf]
    %v37 = vld [vmem:[%s0 + $0x54] sm:$0xf]
    %v38 = vld [vmem:[%s0 + $0x58] sm:$0xf]
    %v39 = vld [vmem:[%s0 + $0x5c] sm:$0xf]
    %v40 = vld [vmem:[%s0 + $0x60] sm:$0xf]
    %v41 = vld [vmem:[%s0 + $0x64] sm:$0xf]
    %v42 = vld [vmem:[%s0 + $0x68] sm:$0xf]
    %v43 = vld [vmem:[%s0 + $0x6c] sm:$0xf]
    %v44 = vld [vmem:[%s0 + $0x70] sm:$0xf]
    %v45 = vld [vmem:[%s0 + $0x74] sm:$0xf]
    %v46 = vld [vmem:[%s0 + $0x78] sm:$0xf]
    %v47 = vld [vmem:[%s0 + $0x7c] sm:$0xf]
    %v48 = vld [vmem:[%s0 + $0x80] sm:$0xf]
    %v49 = vld [vmem:[%s0 + $0x84] sm:$0xf]
    %v50 = vld [vmem:[%s0 + $0x88] sm:$0xf]
    %v51 = vld [vmem:[%s0 + $0x8c] sm:$0xf]
    %v52 = vld [vmem:[%s0 + $0x90] sm:$0xf]
    %v53 = vld [vmem:[%s0 + $0x94] sm:$0xf]
    %v54 = vld [vmem:[%s0 + $0x98] sm:$0xf]
    %v55 = vld [vmem:[%s0 + $0x9c] sm:$0xf]
    %v56 = vld [vmem:[%s0 + $0xa0] sm:$0xf]
    %v57 = vld [vmem:[%s0 + $0xa4] sm:$0xf]
    %v58 = vld [vmem:[%s0 + $0xa8] sm:$0xf]
    %v59 = vld [vmem:[%s0 + $0xac] sm:$0xf]
    %v60 = vld [vmem:[%s0 + $0xb0] sm:$0xf]
    %v61 = vld [vmem:[%s0 + $0xb4] sm:$0xf]
    %v62 = vld [vmem:[%s0 + $0xb8] sm:$0xf]
    %v63 = vld [vmem:[%s0 + $0xbc] sm:$0xf]
    %v64 = vld [vmem:[%s0 + $0xc0] sm:$0xf]
    %v65 = vld [vmem:[%s0 + $0xc4] sm:$0xf]
    %v66 = vld [vmem:[%s0 + $0xc8] sm:$0xf]
    %v67 = vld [vmem:[%s0 + $0xcc] sm:$0xf]
    %v68 = vld [vmem:[%s0 + $0xd0] sm:$0xf]
    %v69 = vld [vmem:[%s0 + $0xd4] sm:$0xf]
    %v70 = vld [vmem:[%s0 + $0xd8] sm:$0xf]
    %v71 = vld [vmem:[%s0 + $0xdc] sm:$0xf]
    %v72 = vld [vmem:[%s0 + $0xe0] sm:$0xf]
    %v73 = vld [vmem:[%s0 + $0xe4] sm:$0xf]
    %v74 = vld [vmem:[%s0 + $0xe8] sm:$0xf]
    %v75 = vld [vmem:[%s0 + $0xec] sm:$0xf]
    %v76 = vld [vmem:[%s0 + $0xf0] sm:$0xf]
    %v77 = vld [vmem:[%s0 + $0xf4] sm:$0xf]
    %v78 = vld [vmem:[%s0 + $0xf8] sm:$0xf]
    %v79 = vld [vmem:[%s0 + $0xfc] sm:$0xf]
    %v80 = vld [vmem:[%s1] sm:$0xf]
    %v81 = vld [vmem:[%s2] sm:$0x1]
    %v83 = vlaneseq
    %v84 = vshrl.u32 %v83, 7
    %v85 = vsub.s32 0, %v84
    %v86 = vrot.slane %v81, %v85
    %v152 = vunpack.c.l.b16 %v16
    %v153 = vunpack.c.l.b16 %v17
    %v154 = vunpack.c.l.b16 %v18
    %v155 = vunpack.c.l.b16 %v19
    %v156 = vunpack.c.l.b16 %v20
    %v157 = vunpack.c.l.b16 %v21
    %v158 = vunpack.c.l.b16 %v22
    %v159 = vunpack.c.l.b16 %v23
    %v160 = vunpack.c.l.b16 %v24
    %v161 = vunpack.c.l.b16 %v25
    %v162 = vunpack.c.l.b16 %v26
    %v163 = vunpack.c.l.b16 %v27
    %v164 = vunpack.c.l.b16 %v28
    %v165 = vunpack.c.l.b16 %v29
    %v166 = vunpack.c.l.b16 %v30
    %v167 = vunpack.c.l.b16 %v31
    %v168 = vunpack.c.l.b16 %v32
    %v169 = vunpack.c.l.b16 %v33
    %v170 = vunpack.c.l.b16 %v34
    %v171 = vunpack.c.l.b16 %v35
    %v172 = vunpack.c.l.b16 %v36
    %v173 = vunpack.c.l.b16 %v37
    %v174 = vunpack.c.l.b16 %v38
    %v175 = vunpack.c.l.b16 %v39
    %v176 = vunpack.c.l.b16 %v40
    %v177 = vunpack.c.l.b16 %v41
    %v178 = vunpack.c.l.b16 %v42
    %v179 = vunpack.c.l.b16 %v43
    %v180 = vunpack.c.l.b16 %v44
    %v181 = vunpack.c.l.b16 %v45
    %v182 = vunpack.c.l.b16 %v46
    %v183 = vunpack.c.l.b16 %v47
    %v184 = vunpack.c.l.b16 %v48
    %v185 = vunpack.c.l.b16 %v49
    %v186 = vunpack.c.l.b16 %v50
    %v187 = vunpack.c.l.b16 %v51
    %v188 = vunpack.c.l.b16 %v52
    %v189 = vunpack.c.l.b16 %v53
    %v190 = vunpack.c.l.b16 %v54
    %v191 = vunpack.c.l.b16 %v55
    %v192 = vunpack.c.l.b16 %v56
    %v193 = vunpack.c.l.b16 %v57
    %v194 = vunpack.c.l.b16 %v58
    %v195 = vunpack.c.l.b16 %v59
    %v196 = vunpack.c.l.b16 %v60
    %v197 = vunpack.c.l.b16 %v61
    %v198 = vunpack.c.l.b16 %v62
    %v199 = vunpack.c.l.b16 %v63
    %v200 = vunpack.c.l.b16 %v64
    %v201 = vunpack.c.l.b16 %v65
    %v202 = vunpack.c.l.b16 %v66
    %v203 = vunpack.c.l.b16 %v67
    %v204 = vunpack.c.l.b16 %v68
    %v205 = vunpack.c.l.b16 %v69
    %v206 = vunpack.c.l.b16 %v70
    %v207 = vunpack.c.l.b16 %v71
    %v208 = vunpack.c.l.b16 %v72
    %v209 = vunpack.c.l.b16 %v73
    %v210 = vunpack.c.l.b16 %v74
    %v211 = vunpack.c.l.b16 %v75
    %v212 = vunpack.c.l.b16 %v76
    %v213 = vunpack.c.l.b16 %v77
    %v214 = vunpack.c.l.b16 %v78
    %v215 = vunpack.c.l.b16 %v79
    %v216 = vpack.c.b16 %v153, %v152
    %v217 = vpack.c.b16 %v155, %v154
    %v218 = vpack.c.b16 %v157, %v156
    %v219 = vpack.c.b16 %v159, %v158
    %v220 = vpack.c.b16 %v161, %v160
    %v221 = vpack.c.b16 %v163, %v162
    %v222 = vpack.c.b16 %v165, %v164
    %v223 = vpack.c.b16 %v167, %v166
    %v224 = vpack.c.b16 %v169, %v168
    %v225 = vpack.c.b16 %v171, %v170
    %v226 = vpack.c.b16 %v173, %v172
    %v227 = vpack.c.b16 %v175, %v174
    %v228 = vpack.c.b16 %v177, %v176
    %v229 = vpack.c.b16 %v179, %v178
    %v230 = vpack.c.b16 %v181, %v180
    %v231 = vpack.c.b16 %v183, %v182
    %v232 = vpack.c.b16 %v185, %v184
    %v233 = vpack.c.b16 %v187, %v186
    %v234 = vpack.c.b16 %v189, %v188
    %v235 = vpack.c.b16 %v191, %v190
    %v236 = vpack.c.b16 %v193, %v192
    %v237 = vpack.c.b16 %v195, %v194
    %v238 = vpack.c.b16 %v197, %v196
    %v239 = vpack.c.b16 %v199, %v198
    %v240 = vpack.c.b16 %v201, %v200
    %v241 = vpack.c.b16 %v203, %v202
    %v242 = vpack.c.b16 %v205, %v204
    %v243 = vpack.c.b16 %v207, %v206
    %v244 = vpack.c.b16 %v209, %v208
    %v245 = vpack.c.b16 %v211, %v210
    %v246 = vpack.c.b16 %v213, %v212
    %v247 = vpack.c.b16 %v215, %v214
    %vm248 = vcmask 64512
    %v250 = vsel %vm248, %v216, 0
    %v253 = vsel %vm248, %v217, 0
    %v256 = vsel %vm248, %v218, 0
    %v259 = vsel %vm248, %v219, 0
    %v262 = vsel %vm248, %v220, 0
    %v265 = vsel %vm248, %v221, 0
    %v268 = vsel %vm248, %v222, 0
    %v271 = vsel %vm248, %v223, 0
    %v274 = vsel %vm248, %v224, 0
    %v277 = vsel %vm248, %v225, 0
    %v280 = vsel %vm248, %v226, 0
    %v283 = vsel %vm248, %v227, 0
    %v286 = vsel %vm248, %v228, 0
    %v289 = vsel %vm248, %v229, 0
    %v292 = vsel %vm248, %v230, 0
    %v295 = vsel %vm248, %v231, 0
    %v298 = vsel %vm248, %v232, 0
    %v301 = vsel %vm248, %v233, 0
    %v304 = vsel %vm248, %v234, 0
    %v307 = vsel %vm248, %v235, 0
    %v310 = vsel %vm248, %v236, 0
    %v313 = vsel %vm248, %v237, 0
    %v316 = vsel %vm248, %v238, 0
    %v319 = vsel %vm248, %v239, 0
    %v322 = vsel %vm248, %v240, 0
    %v325 = vsel %vm248, %v241, 0
    %v328 = vsel %vm248, %v242, 0
    %v331 = vsel %vm248, %v243, 0
    %v334 = vsel %vm248, %v244, 0
    %v337 = vsel %vm248, %v245, 0
    %v340 = vsel %vm248, %v246, 0
    %v343 = vsel %vm248, %v247, 0
    %vm345 = vcmask 1043456
    %v347 = vsel %vm345, %v80, 0
    %349 = vmatprep.subr.bf16.mxu0 0
    %350 = vmatpush1.bf16.msra.mxu0 0
    %351 = vmatprep.subr.bf16.mxu0 0
    %352 = vmatpush1.bf16.msra.mxu0 0
    %353 = vmatprep.subr.bf16.mxu0 0
    %354 = vmatpush1.bf16.msra.mxu0 0
    %355 = vmatprep.subr.bf16.mxu0 0
    %356 = vmatpush1.bf16.msra.mxu0 0
    %357 = vmatprep.subr.bf16.mxu0 0
    %358 = vmatpush1.bf16.msra.mxu0 0
    %359 = vmatprep.subr.bf16.mxu0 0
    %360 = vmatpush1.bf16.msra.mxu0 0
    %361 = vmatprep.subr.bf16.mxu0 0
    %362 = vmatpush1.bf16.msra.mxu0 0
    %363 = vmatprep.subr.bf16.mxu0 0
    %364 = vmatpush1.bf16.msra.mxu0 %v347
    %365 = vmatprep.subr.bf16.mxu0 0
    %366 = vmatpush2.bf16.msra.mxu0 0
    %367 = vmatprep.subr.bf16.mxu0 0
    %368 = vmatpush2.bf16.msra.mxu0 0
    %369 = vmatprep.subr.bf16.mxu0 0
    %370 = vmatpush2.bf16.msra.mxu0 0
    %371 = vmatprep.subr.bf16.mxu0 0
    %372 = vmatpush2.bf16.msra.mxu0 0
    %373 = vmatprep.subr.bf16.mxu0 0
    %374 = vmatpush2.bf16.msra.mxu0 0
    %375 = vmatprep.subr.bf16.mxu0 0
    %376 = vmatpush2.bf16.msra.mxu0 0
    %377 = vmatprep.subr.bf16.mxu0 0
    %378 = vmatpush2.bf16.msra.mxu0 0
    %379 = vmatprep.subr.bf16.mxu0 0
    %380 = vmatpush2.bf16.msra.mxu0 0
    %381 = vmatprep.mubr.bf16.mxu0 0
    %382 = vmatmul.mubr.bf16.gmra.mxu0 %v250
    %v383 = vpop.f32.mrf.mxu0
    %v384 = vadd.f32 %v86, %v383
    %v385 = vpop.f32.mrf.mxu0
    %v386 = vpop.f32.mrf.mxu0
    %v387 = vadd.f32 %v86, %v386
    %v388 = vpop.f32.mrf.mxu0
    %389 = vmatprep.mubr.bf16.mxu0 0
    %390 = vmatmul.mubr.bf16.gmra.mxu0 %v253
    %v391 = vpop.f32.mrf.mxu0
    %v392 = vadd.f32 %v86, %v391
    %v393 = vpop.f32.mrf.mxu0
    %v394 = vpop.f32.mrf.mxu0
    %v395 = vadd.f32 %v86, %v394
    %v396 = vpop.f32.mrf.mxu0
    %397 = vmatprep.mubr.bf16.mxu0 0
    %398 = vmatmul.mubr.bf16.gmra.mxu0 %v256
    %v399 = vpop.f32.mrf.mxu0
    %v400 = vadd.f32 %v86, %v399
    %v401 = vpop.f32.mrf.mxu0
    %v402 = vpop.f32.mrf.mxu0
    %v403 = vadd.f32 %v86, %v402
    %v404 = vpop.f32.mrf.mxu0
    %405 = vmatprep.mubr.bf16.mxu0 0
    %406 = vmatmul.mubr.bf16.gmra.mxu0 %v259
    %v407 = vpop.f32.mrf.mxu0
    %v408 = vadd.f32 %v86, %v407
    %v409 = vpop.f32.mrf.mxu0
    %v410 = vpop.f32.mrf.mxu0
    %v411 = vadd.f32 %v86, %v410
    %v412 = vpop.f32.mrf.mxu0
    %413 = vmatprep.mubr.bf16.mxu0 0
    %414 = vmatmul.mubr.bf16.gmra.mxu0 %v262
    %v415 = vpop.f32.mrf.mxu0
    %v416 = vadd.f32 %v86, %v415
    %v417 = vpop.f32.mrf.mxu0
    %v418 = vpop.f32.mrf.mxu0
    %v419 = vadd.f32 %v86, %v418
    %v420 = vpop.f32.mrf.mxu0
    %421 = vmatprep.mubr.bf16.mxu0 0
    %422 = vmatmul.mubr.bf16.gmra.mxu0 %v265
    %v423 = vpop.f32.mrf.mxu0
    %v424 = vadd.f32 %v86, %v423
    %v425 = vpop.f32.mrf.mxu0
    %v426 = vpop.f32.mrf.mxu0
    %v427 = vadd.f32 %v86, %v426
    %v428 = vpop.f32.mrf.mxu0
    %429 = vmatprep.mubr.bf16.mxu0 0
    %430 = vmatmul.mubr.bf16.gmra.mxu0 %v268
    %v431 = vpop.f32.mrf.mxu0
    %v432 = vadd.f32 %v86, %v431
    %v433 = vpop.f32.mrf.mxu0
    %v434 = vpop.f32.mrf.mxu0
    %v435 = vadd.f32 %v86, %v434
    %v436 = vpop.f32.mrf.mxu0
    %437 = vmatprep.mubr.bf16.mxu0 0
    %438 = vmatmul.mubr.bf16.gmra.mxu0 %v271
    %v439 = vpop.f32.mrf.mxu0
    %v440 = vadd.f32 %v86, %v439
    %v441 = vpop.f32.mrf.mxu0
    %v442 = vpop.f32.mrf.mxu0
    %v443 = vadd.f32 %v86, %v442
    %v444 = vpop.f32.mrf.mxu0
    %445 = vmatprep.mubr.bf16.mxu0 0
    %446 = vmatmul.mubr.bf16.gmra.mxu0 %v274
    %v447 = vpop.f32.mrf.mxu0
    %v448 = vadd.f32 %v86, %v447
    %v449 = vpop.f32.mrf.mxu0
    %v450 = vpop.f32.mrf.mxu0
    %v451 = vadd.f32 %v86, %v450
    %v452 = vpop.f32.mrf.mxu0
    %453 = vmatprep.mubr.bf16.mxu0 0
    %454 = vmatmul.mubr.bf16.gmra.mxu0 %v277
    %v455 = vpop.f32.mrf.mxu0
    %v456 = vadd.f32 %v86, %v455
    %v457 = vpop.f32.mrf.mxu0
    %v458 = vpop.f32.mrf.mxu0
    %v459 = vadd.f32 %v86, %v458
    %v460 = vpop.f32.mrf.mxu0
    %461 = vmatprep.mubr.bf16.mxu0 0
    %462 = vmatmul.mubr.bf16.gmra.mxu0 %v280
    %v463 = vpop.f32.mrf.mxu0
    %v464 = vadd.f32 %v86, %v463
    %v465 = vpop.f32.mrf.mxu0
    %v466 = vpop.f32.mrf.mxu0
    %v467 = vadd.f32 %v86, %v466
    %v468 = vpop.f32.mrf.mxu0
    %469 = vmatprep.mubr.bf16.mxu0 0
    %470 = vmatmul.mubr.bf16.gmra.mxu0 %v283
    %v471 = vpop.f32.mrf.mxu0
    %v472 = vadd.f32 %v86, %v471
    %v473 = vpop.f32.mrf.mxu0
    %v474 = vpop.f32.mrf.mxu0
    %v475 = vadd.f32 %v86, %v474
    %v476 = vpop.f32.mrf.mxu0
    %477 = vmatprep.mubr.bf16.mxu0 0
    %478 = vmatmul.mubr.bf16.gmra.mxu0 %v286
    %v479 = vpop.f32.mrf.mxu0
    %v480 = vadd.f32 %v86, %v479
    %v481 = vpop.f32.mrf.mxu0
    %v482 = vpop.f32.mrf.mxu0
    %v483 = vadd.f32 %v86, %v482
    %v484 = vpop.f32.mrf.mxu0
    %485 = vmatprep.mubr.bf16.mxu0 0
    %486 = vmatmul.mubr.bf16.gmra.mxu0 %v289
    %v487 = vpop.f32.mrf.mxu0
    %v488 = vadd.f32 %v86, %v487
    %v489 = vpop.f32.mrf.mxu0
    %v490 = vpop.f32.mrf.mxu0
    %v491 = vadd.f32 %v86, %v490
    %v492 = vpop.f32.mrf.mxu0
    %493 = vmatprep.mubr.bf16.mxu0 0
    %494 = vmatmul.mubr.bf16.gmra.mxu0 %v292
    %v495 = vpop.f32.mrf.mxu0
    %v496 = vadd.f32 %v86, %v495
    %v497 = vpop.f32.mrf.mxu0
    %v498 = vpop.f32.mrf.mxu0
    %v499 = vadd.f32 %v86, %v498
    %v500 = vpop.f32.mrf.mxu0
    %501 = vmatprep.mubr.bf16.mxu0 0
    %502 = vmatmul.mubr.bf16.gmra.mxu0 %v295
    %v503 = vpop.f32.mrf.mxu0
    %v504 = vadd.f32 %v86, %v503
    %v505 = vpop.f32.mrf.mxu0
    %v506 = vpop.f32.mrf.mxu0
    %v507 = vadd.f32 %v86, %v506
    %v508 = vpop.f32.mrf.mxu0
    %509 = vmatprep.mubr.bf16.mxu0 0
    %510 = vmatmul.mubr.bf16.gmra.mxu0 %v298
    %v511 = vpop.f32.mrf.mxu0
    %v512 = vadd.f32 %v86, %v511
    %v513 = vpop.f32.mrf.mxu0
    %v514 = vpop.f32.mrf.mxu0
    %v515 = vadd.f32 %v86, %v514
    %v516 = vpop.f32.mrf.mxu0
    %517 = vmatprep.mubr.bf16.mxu0 0
    %518 = vmatmul.mubr.bf16.gmra.mxu0 %v301
    %v519 = vpop.f32.mrf.mxu0
    %v520 = vadd.f32 %v86, %v519
    %v521 = vpop.f32.mrf.mxu0
    %v522 = vpop.f32.mrf.mxu0
    %v523 = vadd.f32 %v86, %v522
    %v524 = vpop.f32.mrf.mxu0
    %525 = vmatprep.mubr.bf16.mxu0 0
    %526 = vmatmul.mubr.bf16.gmra.mxu0 %v304
    %v527 = vpop.f32.mrf.mxu0
    %v528 = vadd.f32 %v86, %v527
    %v529 = vpop.f32.mrf.mxu0
    %v530 = vpop.f32.mrf.mxu0
    %v531 = vadd.f32 %v86, %v530
    %v532 = vpop.f32.mrf.mxu0
    %533 = vmatprep.mubr.bf16.mxu0 0
    %534 = vmatmul.mubr.bf16.gmra.mxu0 %v307
    %v535 = vpop.f32.mrf.mxu0
    %v536 = vadd.f32 %v86, %v535
    %v537 = vpop.f32.mrf.mxu0
    %v538 = vpop.f32.mrf.mxu0
    %v539 = vadd.f32 %v86, %v538
    %v540 = vpop.f32.mrf.mxu0
    %541 = vmatprep.mubr.bf16.mxu0 0
    %542 = vmatmul.mubr.bf16.gmra.mxu0 %v310
    %v543 = vpop.f32.mrf.mxu0
    %v544 = vadd.f32 %v86, %v543
    %v545 = vpop.f32.mrf.mxu0
    %v546 = vpop.f32.mrf.mxu0
    %v547 = vadd.f32 %v86, %v546
    %v548 = vpop.f32.mrf.mxu0
    %549 = vmatprep.mubr.bf16.mxu0 0
    %550 = vmatmul.mubr.bf16.gmra.mxu0 %v313
    %v551 = vpop.f32.mrf.mxu0
    %v552 = vadd.f32 %v86, %v551
    %v553 = vpop.f32.mrf.mxu0
    %v554 = vpop.f32.mrf.mxu0
    %v555 = vadd.f32 %v86, %v554
    %v556 = vpop.f32.mrf.mxu0
    %557 = vmatprep.mubr.bf16.mxu0 0
    %558 = vmatmul.mubr.bf16.gmra.mxu0 %v316
    %v559 = vpop.f32.mrf.mxu0
    %v560 = vadd.f32 %v86, %v559
    %v561 = vpop.f32.mrf.mxu0
    %v562 = vpop.f32.mrf.mxu0
    %v563 = vadd.f32 %v86, %v562
    %v564 = vpop.f32.mrf.mxu0
    %565 = vmatprep.mubr.bf16.mxu0 0
    %566 = vmatmul.mubr.bf16.gmra.mxu0 %v319
    %v567 = vpop.f32.mrf.mxu0
    %v568 = vadd.f32 %v86, %v567
    %v569 = vpop.f32.mrf.mxu0
    %v570 = vpop.f32.mrf.mxu0
    %v571 = vadd.f32 %v86, %v570
    %v572 = vpop.f32.mrf.mxu0
    %573 = vmatprep.mubr.bf16.mxu0 0
    %574 = vmatmul.mubr.bf16.gmra.mxu0 %v322
    %v575 = vpop.f32.mrf.mxu0
    %v576 = vadd.f32 %v86, %v575
    %v577 = vpop.f32.mrf.mxu0
    %v578 = vpop.f32.mrf.mxu0
    %v579 = vadd.f32 %v86, %v578
    %v580 = vpop.f32.mrf.mxu0
    %581 = vmatprep.mubr.bf16.mxu0 0
    %582 = vmatmul.mubr.bf16.gmra.mxu0 %v325
    %v583 = vpop.f32.mrf.mxu0
    %v584 = vadd.f32 %v86, %v583
    %v585 = vpop.f32.mrf.mxu0
    %v586 = vpop.f32.mrf.mxu0
    %v587 = vadd.f32 %v86, %v586
    %v588 = vpop.f32.mrf.mxu0
    %589 = vmatprep.mubr.bf16.mxu0 0
    %590 = vmatmul.mubr.bf16.gmra.mxu0 %v328
    %v591 = vpop.f32.mrf.mxu0
    %v592 = vadd.f32 %v86, %v591
    %v593 = vpop.f32.mrf.mxu0
    %v594 = vpop.f32.mrf.mxu0
    %v595 = vadd.f32 %v86, %v594
    %v596 = vpop.f32.mrf.mxu0
    %597 = vmatprep.mubr.bf16.mxu0 0
    %598 = vmatmul.mubr.bf16.gmra.mxu0 %v331
    %v599 = vpop.f32.mrf.mxu0
    %v600 = vadd.f32 %v86, %v599
    %v601 = vpop.f32.mrf.mxu0
    %v602 = vpop.f32.mrf.mxu0
    %v603 = vadd.f32 %v86, %v602
    %v604 = vpop.f32.mrf.mxu0
    %605 = vmatprep.mubr.bf16.mxu0 0
    %606 = vmatmul.mubr.bf16.gmra.mxu0 %v334
    %v607 = vpop.f32.mrf.mxu0
    %v608 = vadd.f32 %v86, %v607
    %v609 = vpop.f32.mrf.mxu0
    %v610 = vpop.f32.mrf.mxu0
    %v611 = vadd.f32 %v86, %v610
    %v612 = vpop.f32.mrf.mxu0
    %613 = vmatprep.mubr.bf16.mxu0 0
    %614 = vmatmul.mubr.bf16.gmra.mxu0 %v337
    %v615 = vpop.f32.mrf.mxu0
    %v616 = vadd.f32 %v86, %v615
    %v617 = vpop.f32.mrf.mxu0
    %v618 = vpop.f32.mrf.mxu0
    %v619 = vadd.f32 %v86, %v618
    %v620 = vpop.f32.mrf.mxu0
    %621 = vmatprep.mubr.bf16.mxu0 0
    %622 = vmatmul.mubr.bf16.gmra.mxu0 %v340
    %v623 = vpop.f32.mrf.mxu0
    %v624 = vadd.f32 %v86, %v623
    %v625 = vpop.f32.mrf.mxu0
    %v626 = vpop.f32.mrf.mxu0
    %v627 = vadd.f32 %v86, %v626
    %v628 = vpop.f32.mrf.mxu0
    %629 = vmatprep.mubr.bf16.mxu0 0
    %630 = vmatmul.mubr.bf16.gmra.mxu0 %v343
    %v631 = vpop.f32.mrf.mxu0
    %v632 = vadd.f32 %v86, %v631
    %v633 = vpop.f32.mrf.mxu0
    %v634 = vpop.f32.mrf.mxu0
    %v635 = vadd.f32 %v86, %v634
    %v636 = vpop.f32.mrf.mxu0
    %637 = vdwg.mxu0
    %v638 = vpack.c.bf16 %v387, %v384
    %v639 = vpack.c.bf16 %v395, %v392
    %v640 = vpack.c.bf16 %v403, %v400
    %v641 = vpack.c.bf16 %v411, %v408
    %v642 = vpack.c.bf16 %v419, %v416
    %v643 = vpack.c.bf16 %v427, %v424
    %v644 = vpack.c.bf16 %v435, %v432
    %v645 = vpack.c.bf16 %v443, %v440
    %v646 = vpack.c.bf16 %v451, %v448
    %v647 = vpack.c.bf16 %v459, %v456
    %v648 = vpack.c.bf16 %v467, %v464
    %v649 = vpack.c.bf16 %v475, %v472
    %v650 = vpack.c.bf16 %v483, %v480
    %v651 = vpack.c.bf16 %v491, %v488
    %v652 = vpack.c.bf16 %v499, %v496
    %v653 = vpack.c.bf16 %v507, %v504
    %v654 = vpack.c.bf16 %v515, %v512
    %v655 = vpack.c.bf16 %v523, %v520
    %v656 = vpack.c.bf16 %v531, %v528
    %v657 = vpack.c.bf16 %v539, %v536
    %v658 = vpack.c.bf16 %v547, %v544
    %v659 = vpack.c.bf16 %v555, %v552
    %v660 = vpack.c.bf16 %v563, %v560
    %v661 = vpack.c.bf16 %v571, %v568
    %v662 = vpack.c.bf16 %v579, %v576
    %v663 = vpack.c.bf16 %v587, %v584
    %v664 = vpack.c.bf16 %v595, %v592
    %v665 = vpack.c.bf16 %v603, %v600
    %v666 = vpack.c.bf16 %v611, %v608
    %v667 = vpack.c.bf16 %v619, %v616
    %v668 = vpack.c.bf16 %v627, %v624
    %v669 = vpack.c.bf16 %v635, %v632
    %v702 = vunpack.c.l.b16 %v638
    %v703 = vunpack.c.h.b16 %v638
    %v704 = vunpack.c.l.b16 %v639
    %v705 = vunpack.c.h.b16 %v639
    %v706 = vunpack.c.l.b16 %v640
    %v707 = vunpack.c.h.b16 %v640
    %v708 = vunpack.c.l.b16 %v641
    %v709 = vunpack.c.h.b16 %v641
    %v710 = vunpack.c.l.b16 %v642
    %v711 = vunpack.c.h.b16 %v642
    %v712 = vunpack.c.l.b16 %v643
    %v713 = vunpack.c.h.b16 %v643
    %v714 = vunpack.c.l.b16 %v644
    %v715 = vunpack.c.h.b16 %v644
    %v716 = vunpack.c.l.b16 %v645
    %v717 = vunpack.c.h.b16 %v645
    %v718 = vunpack.c.l.b16 %v646
    %v719 = vunpack.c.h.b16 %v646
    %v720 = vunpack.c.l.b16 %v647
    %v721 = vunpack.c.h.b16 %v647
    %v722 = vunpack.c.l.b16 %v648
    %v723 = vunpack.c.h.b16 %v648
    %v724 = vunpack.c.l.b16 %v649
    %v725 = vunpack.c.h.b16 %v649
    %v726 = vunpack.c.l.b16 %v650
    %v727 = vunpack.c.h.b16 %v650
    %v728 = vunpack.c.l.b16 %v651
    %v729 = vunpack.c.h.b16 %v651
    %v730 = vunpack.c.l.b16 %v652
    %v731 = vunpack.c.h.b16 %v652
    %v732 = vunpack.c.l.b16 %v653
    %v733 = vunpack.c.h.b16 %v653
    %v734 = vunpack.c.l.b16 %v654
    %v735 = vunpack.c.h.b16 %v654
    %v736 = vunpack.c.l.b16 %v655
    %v737 = vunpack.c.h.b16 %v655
    %v738 = vunpack.c.l.b16 %v656
    %v739 = vunpack.c.h.b16 %v656
    %v740 = vunpack.c.l.b16 %v657
    %v741 = vunpack.c.h.b16 %v657
    %v742 = vunpack.c.l.b16 %v658
    %v743 = vunpack.c.h.b16 %v658
    %v744 = vunpack.c.l.b16 %v659
    %v745 = vunpack.c.h.b16 %v659
    %v746 = vunpack.c.l.b16 %v660
    %v747 = vunpack.c.h.b16 %v660
    %v748 = vunpack.c.l.b16 %v661
    %v749 = vunpack.c.h.b16 %v661
    %v750 = vunpack.c.l.b16 %v662
    %v751 = vunpack.c.h.b16 %v662
    %v752 = vunpack.c.l.b16 %v663
    %v753 = vunpack.c.h.b16 %v663
    %v754 = vunpack.c.l.b16 %v664
    %v755 = vunpack.c.h.b16 %v664
    %v756 = vunpack.c.l.b16 %v665
    %v757 = vunpack.c.h.b16 %v665
    %v758 = vunpack.c.l.b16 %v666
    %v759 = vunpack.c.h.b16 %v666
    %v760 = vunpack.c.l.b16 %v667
    %v761 = vunpack.c.h.b16 %v667
    %v762 = vunpack.c.l.b16 %v668
    %v763 = vunpack.c.h.b16 %v668
    %v764 = vunpack.c.l.b16 %v669
    %v765 = vunpack.c.h.b16 %v669
    %v766 = vpack.c.b16 %v702, %v702
    %v767 = vpack.c.b16 %v703, %v703
    %v768 = vpack.c.b16 %v704, %v704
    %v769 = vpack.c.b16 %v705, %v705
    %v770 = vpack.c.b16 %v706, %v706
    %v771 = vpack.c.b16 %v707, %v707
    %v772 = vpack.c.b16 %v708, %v708
    %v773 = vpack.c.b16 %v709, %v709
    %v774 = vpack.c.b16 %v710, %v710
    %v775 = vpack.c.b16 %v711, %v711
    %v776 = vpack.c.b16 %v712, %v712
    %v777 = vpack.c.b16 %v713, %v713
    %v778 = vpack.c.b16 %v714, %v714
    %v779 = vpack.c.b16 %v715, %v715
    %v780 = vpack.c.b16 %v716, %v716
    %v781 = vpack.c.b16 %v717, %v717
    %v782 = vpack.c.b16 %v718, %v718
    %v783 = vpack.c.b16 %v719, %v719
    %v784 = vpack.c.b16 %v720, %v720
    %v785 = vpack.c.b16 %v721, %v721
    %v786 = vpack.c.b16 %v722, %v722
    %v787 = vpack.c.b16 %v723, %v723
    %v788 = vpack.c.b16 %v724, %v724
    %v789 = vpack.c.b16 %v725, %v725
    %v790 = vpack.c.b16 %v726, %v726
    %v791 = vpack.c.b16 %v727, %v727
    %v792 = vpack.c.b16 %v728, %v728
    %v793 = vpack.c.b16 %v729, %v729
    %v794 = vpack.c.b16 %v730, %v730
    %v795 = vpack.c.b16 %v731, %v731
    %v796 = vpack.c.b16 %v732, %v732
    %v797 = vpack.c.b16 %v733, %v733
    %v798 = vpack.c.b16 %v734, %v734
    %v799 = vpack.c.b16 %v735, %v735
    %v800 = vpack.c.b16 %v736, %v736
    %v801 = vpack.c.b16 %v737, %v737
    %v802 = vpack.c.b16 %v738, %v738
    %v803 = vpack.c.b16 %v739, %v739
    %v804 = vpack.c.b16 %v740, %v740
    %v805 = vpack.c.b16 %v741, %v741
    %v806 = vpack.c.b16 %v742, %v742
    %v807 = vpack.c.b16 %v743, %v743
    %v808 = vpack.c.b16 %v744, %v744
    %v809 = vpack.c.b16 %v745, %v745
    %v810 = vpack.c.b16 %v746, %v746
    %v811 = vpack.c.b16 %v747, %v747
    %v812 = vpack.c.b16 %v748, %v748
    %v813 = vpack.c.b16 %v749, %v749
    %v814 = vpack.c.b16 %v750, %v750
    %v815 = vpack.c.b16 %v751, %v751
    %v816 = vpack.c.b16 %v752, %v752
    %v817 = vpack.c.b16 %v753, %v753
    %v818 = vpack.c.b16 %v754, %v754
    %v819 = vpack.c.b16 %v755, %v755
    %v820 = vpack.c.b16 %v756, %v756
    %v821 = vpack.c.b16 %v757, %v757
    %v822 = vpack.c.b16 %v758, %v758
    %v823 = vpack.c.b16 %v759, %v759
    %v824 = vpack.c.b16 %v760, %v760
    %v825 = vpack.c.b16 %v761, %v761
    %v826 = vpack.c.b16 %v762, %v762
    %v827 = vpack.c.b16 %v763, %v763
    %v828 = vpack.c.b16 %v764, %v764
    %v829 = vpack.c.b16 %v765, %v765
    %894 = vst [vmem:[#allocation2] sm:$0xf] %v766
    %895 = vst [vmem:[#allocation2 + $0x4] sm:$0xf] %v767
    %896 = vst [vmem:[#allocation2 + $0x8] sm:$0xf] %v768
    %897 = vst [vmem:[#allocation2 + $0xc] sm:$0xf] %v769
    %898 = vst [vmem:[#allocation2 + $0x10] sm:$0xf] %v770
    %899 = vst [vmem:[#allocation2 + $0x14] sm:$0xf] %v771
    %900 = vst [vmem:[#allocation2 + $0x18] sm:$0xf] %v772
    %901 = vst [vmem:[#allocation2 + $0x1c] sm:$0xf] %v773
    %902 = vst [vmem:[#allocation2 + $0x20] sm:$0xf] %v774
    %903 = vst [vmem:[#allocation2 + $0x24] sm:$0xf] %v775
    %904 = vst [vmem:[#allocation2 + $0x28] sm:$0xf] %v776
    %905 = vst [vmem:[#allocation2 + $0x2c] sm:$0xf] %v777
    %906 = vst [vmem:[#allocation2 + $0x30] sm:$0xf] %v778
    %907 = vst [vmem:[#allocation2 + $0x34] sm:$0xf] %v779
    %908 = vst [vmem:[#allocation2 + $0x38] sm:$0xf] %v780
    %909 = vst [vmem:[#allocation2 + $0x3c] sm:$0xf] %v781
    %910 = vst [vmem:[#allocation2 + $0x40] sm:$0xf] %v782
    %911 = vst [vmem:[#allocation2 + $0x44] sm:$0xf] %v783
    %912 = vst [vmem:[#allocation2 + $0x48] sm:$0xf] %v784
    %913 = vst [vmem:[#allocation2 + $0x4c] sm:$0xf] %v785
    %914 = vst [vmem:[#allocation2 + $0x50] sm:$0xf] %v786
    %915 = vst [vmem:[#allocation2 + $0x54] sm:$0xf] %v787
    %916 = vst [vmem:[#allocation2 + $0x58] sm:$0xf] %v788
    %917 = vst [vmem:[#allocation2 + $0x5c] sm:$0xf] %v789
    %918 = vst [vmem:[#allocation2 + $0x60] sm:$0xf] %v790
    %919 = vst [vmem:[#allocation2 + $0x64] sm:$0xf] %v791
    %920 = vst [vmem:[#allocation2 + $0x68] sm:$0xf] %v792
    %921 = vst [vmem:[#allocation2 + $0x6c] sm:$0xf] %v793
    %922 = vst [vmem:[#allocation2 + $0x70] sm:$0xf] %v794
    %923 = vst [vmem:[#allocation2 + $0x74] sm:$0xf] %v795
    %924 = vst [vmem:[#allocation2 + $0x78] sm:$0xf] %v796
    %925 = vst [vmem:[#allocation2 + $0x7c] sm:$0xf] %v797
    %926 = vst [vmem:[#allocation2 + $0x80] sm:$0xf] %v798
    %927 = vst [vmem:[#allocation2 + $0x84] sm:$0xf] %v799
    %928 = vst [vmem:[#allocation2 + $0x88] sm:$0xf] %v800
    %929 = vst [vmem:[#allocation2 + $0x8c] sm:$0xf] %v801
    %930 = vst [vmem:[#allocation2 + $0x90] sm:$0xf] %v802
    %931 = vst [vmem:[#allocation2 + $0x94] sm:$0xf] %v803
    %932 = vst [vmem:[#allocation2 + $0x98] sm:$0xf] %v804
    %933 = vst [vmem:[#allocation2 + $0x9c] sm:$0xf] %v805
    %934 = vst [vmem:[#allocation2 + $0xa0] sm:$0xf] %v806
    %935 = vst [vmem:[#allocation2 + $0xa4] sm:$0xf] %v807
    %936 = vst [vmem:[#allocation2 + $0xa8] sm:$0xf] %v808
    %937 = vst [vmem:[#allocation2 + $0xac] sm:$0xf] %v809
    %938 = vst [vmem:[#allocation2 + $0xb0] sm:$0xf] %v810
    %939 = vst [vmem:[#allocation2 + $0xb4] sm:$0xf] %v811
    %940 = vst [vmem:[#allocation2 + $0xb8] sm:$0xf] %v812
    %941 = vst [vmem:[#allocation2 + $0xbc] sm:$0xf] %v813
    %942 = vst [vmem:[#allocation2 + $0xc0] sm:$0xf] %v814
    %943 = vst [vmem:[#allocation2 + $0xc4] sm:$0xf] %v815
    %944 = vst [vmem:[#allocation2 + $0xc8] sm:$0xf] %v816
    %945 = vst [vmem:[#allocation2 + $0xcc] sm:$0xf] %v817
    %946 = vst [vmem:[#allocation2 + $0xd0] sm:$0xf] %v818
    %947 = vst [vmem:[#allocation2 + $0xd4] sm:$0xf] %v819
    %948 = vst [vmem:[#allocation2 + $0xd8] sm:$0xf] %v820
    %949 = vst [vmem:[#allocation2 + $0xdc] sm:$0xf] %v821
    %950 = vst [vmem:[#allocation2 + $0xe0] sm:$0xf] %v822
    %951 = vst [vmem:[#allocation2 + $0xe4] sm:$0xf] %v823
    %952 = vst [vmem:[#allocation2 + $0xe8] sm:$0xf] %v824
    %953 = vst [vmem:[#allocation2 + $0xec] sm:$0xf] %v825
    %954 = vst [vmem:[#allocation2 + $0xf0] sm:$0xf] %v826
    %955 = vst [vmem:[#allocation2 + $0xf4] sm:$0xf] %v827
    %956 = vst [vmem:[#allocation2 + $0xf8] sm:$0xf] %v828
    %957 = vst [vmem:[#allocation2 + $0xfc] sm:$0xf] %v829
    // Predicated region
    $region14: #{tpu_custom_call.1} parent=1 // pred_check
      _
    $region15: #{tpu_custom_call.1} parent=1 // pred_check_branch
      %959 = sbr.rel (0) target = $region17
    $region16: #{tpu_custom_call.1} parent=1 // pred_region
      %s961 = ssub.s32 4096, 4096
      %962 = vsyncadd [#allocation3], %s961
      %s963 = sshll.u32 [#allocation2], 4
      %s964 = int_to_ptr.vmem [resolvable:$true] %s963
      %969 = dma.vmem_to_hbm [thread:$0]  %s964, 4096, %s3, [#allocation3], 64, 64, 4
    $region17: #{tpu_custom_call.1} parent=1 // pred_fallthru
      _
    // Predicated region
    $region18: #{tpu_custom_call.1} parent=1 // pred_check
      _
    $region19: #{tpu_custom_call.1} parent=1 // pred_check_branch
      %971 = sbr.rel (0) target = $region21
    $region20: #{tpu_custom_call.1} parent=1 // pred_region
      %972 = dma.done [#allocation3], 4096
    $region21: #{tpu_custom_call.1} parent=1 // pred_fallthru
      _
    %973 = vsyncpa [#allocation3], 1

</llo_original>
